<compile_context>
chip_gen: v7x
topology: tpu7x:2x2x1
jax: 0.10.0
libtpu: 0.0.40
codegen_flags: <defaults>
</compile_context>

<pallas_src>
import functools

import jax
import jax.numpy as jnp
from jax.experimental import pallas as pl
from jax.experimental.pallas import tpu as pltpu

LANES = 128
SUBLANES = 8
MAX_BLOCK_ROWS = 2048   # 2048*128*4 B = 1 MiB per f32 input tile; 2 inputs x
                        # 2 buffers = 4 MiB VMEM, inside every generation's default.
NSPLIT = 2              # leading "parallel" grid axis -> 2 TensorCores on v7x.


def _bce_partial_kernel(yp_ref, y_ref, out_ref, acc_ref, *,
                        n, rows_pc, block_rows):
    c = pl.program_id(0)          # core-slab index (parallel axis)
    k = pl.program_id(1)          # reduction step within the slab

    @pl.when(k == 0)
    def _init():
        acc_ref[...] = jnp.zeros_like(acc_ref)

    # Upcast inside the kernel (HBM reads stay in native dtype).
    yp = yp_ref[0].astype(jnp.float32)
    y = y_ref[0].astype(jnp.float32)

    # Stable softplus form of  y*log(1+exp(-yp)) + (1-y)*log(1+exp(yp)):
    #   max(yp, 0) - y*yp + log1p(exp(-|yp|))
    # 1 exp + 1 log per element (EUP) instead of 2 + 2.
    val = jnp.maximum(yp, 0.0) - y * yp + jnp.log1p(jnp.exp(-jnp.abs(yp)))

    # A block is "clean" iff every element it covers is a real input element
    # (no lane/row padding and no DMA overhang past this slab's row extent).
    row_end = (k + 1) * block_rows
    is_clean = jnp.logical_and(row_end <= rows_pc,
                               (c * rows_pc + row_end) * LANES <= n)

    @pl.when(is_clean)
    def _fast_path():
        acc_ref[...] += val.reshape(
            block_rows // SUBLANES, SUBLANES, LANES).sum(axis=0)

    @pl.when(jnp.logical_not(is_clean))
    def _masked_path():
        row = (jax.lax.broadcasted_iota(jnp.int32, (block_rows, LANES), 0)
               + k * block_rows)
        col = jax.lax.broadcasted_iota(jnp.int32, (block_rows, LANES), 1)
        flat = (c * rows_pc + row) * LANES + col
        mask = jnp.logical_and(row < rows_pc, flat < n)
        acc_ref[...] += jnp.where(mask, val, 0.0).reshape(
            block_rows // SUBLANES, SUBLANES, LANES).sum(axis=0)

    @pl.when(k == pl.num_programs(1) - 1)
    def _store():
        out_ref[...] = acc_ref[...].reshape(out_ref.shape)


def my_bce_loss(y_pred, y):
    """Pallas equivalent of My_BCELoss.forward(Y_pred, Y) -> scalar f32."""
    yp_flat = y_pred.reshape(-1)
    y_flat = y.reshape(-1)
    n = yp_flat.shape[0]

    # Sublane packing granularity: 8 rows for 32-bit, 16 for 16-bit, 32 for 8-bit.
    gran = max(SUBLANES,
               32 // yp_flat.dtype.itemsize,
               32 // y_flat.dtype.itemsize)

    rows = pl.cdiv(n, LANES)
    rows_pc = pl.cdiv(pl.cdiv(rows, NSPLIT), gran) * gran   # rows per core slab
    block_rows = min(MAX_BLOCK_ROWS, rows_pc)               # multiple of gran & 8
    num_k = pl.cdiv(rows_pc, block_rows)

    # Pad only up to NSPLIT * rows_pc rows (< ~2 KiB of elements); padded and
    # overhang elements are neutralized by the masked path in the kernel.
    total = NSPLIT * rows_pc * LANES
    pad = total - n
    if pad:
        yp_flat = jnp.pad(yp_flat, (0, pad))
        y_flat = jnp.pad(y_flat, (0, pad))

    yp_3d = yp_flat.reshape(NSPLIT, rows_pc, LANES)
    y_3d = y_flat.reshape(NSPLIT, rows_pc, LANES)

    kernel = functools.partial(_bce_partial_kernel, n=n, rows_pc=rows_pc,
                               block_rows=block_rows)

    partials = pl.pallas_call(
        kernel,
        out_shape=jax.ShapeDtypeStruct((NSPLIT, SUBLANES, LANES), jnp.float32),
        grid=(NSPLIT, num_k),
        in_specs=[
            pl.BlockSpec((1, block_rows, LANES), lambda c, k: (c, k, 0)),
            pl.BlockSpec((1, block_rows, LANES), lambda c, k: (c, k, 0)),
        ],
        out_specs=pl.BlockSpec((1, SUBLANES, LANES), lambda c, k: (c, 0, 0)),
        scratch_shapes=[pltpu.VMEM((SUBLANES, LANES), jnp.float32)],
        compiler_params=pltpu.CompilerParams(
            dimension_semantics=("parallel", "arbitrary"),
        ),
    )(yp_3d, y_3d)

    # Final cross-lane/sublane reduce over 2*8*128 floats: trivial XLA op.
    return partials.sum() / jnp.float32(n)


def _reference(y_pred, y):
    yp = y_pred.reshape(-1).astype(jnp.float32)
    yf = y.reshape(-1).astype(jnp.float32)
    return jnp.sum(
        yf * jnp.log(1.0 + jnp.exp(-yp)) + (1.0 - yf) * jnp.log(1.0 + jnp.exp(yp))
    ) / yf.shape[0]


if __name__ == "__main__":
    key = jax.random.PRNGKey(0)
    k1, k2 = jax.random.split(key)
    # Small segmentation-style NCHW inputs.
    shape = (2, 4, 16, 16)
    y_pred = jax.random.normal(k1, shape, dtype=jnp.float32)        # logits
    y = (jax.random.uniform(k2, shape) > 0.5).astype(jnp.float32)   # binary targets

    loss = my_bce_loss(y_pred, y)
    jax.block_until_ready(loss)

    ref = _reference(y_pred, y)
    assert jnp.allclose(loss, ref, rtol=1e-5, atol=1e-5), (loss, ref)
    print("KERNEL_OK")
</pallas_src>

<mosaic_0001>
module attributes {stable_mosaic.version = 11 : i64} {
  func.func @_bce_partial_kernel(%arg0: i32, %arg1: i32, %arg2: memref<1x8x128xf32, #tpu.memory_space<vmem>>, %arg3: memref<1x8x128xf32, #tpu.memory_space<vmem>>, %arg4: memref<1x8x128xf32, #tpu.memory_space<vmem>>, %arg5: memref<8x128xf32, #tpu.memory_space<vmem>>) attributes {dimension_semantics = [#tpu.dimension_semantics<parallel>, #tpu.dimension_semantics<arbitrary>], iteration_bounds = array<i64: 2, 1>, scalar_prefetch = 0 : i64, scratch_operands = 1 : i64, tpu.core_type = #tpu.core_type<tc>, window_params = [{transform_indices = @transform_0, window_bounds = array<i64: 1, 8, 128>}, {transform_indices = @transform_1, window_bounds = array<i64: 1, 8, 128>}, {transform_indices = @transform_2, window_bounds = array<i64: 1, 8, 128>}]} {
    %c0_i32 = arith.constant 0 : i32
    %0 = arith.cmpi eq, %arg1, %c0_i32 : i32
    %1 = arith.extui %0 : i1 to i32
    %c0_i32_0 = arith.constant 0 : i32
    %2 = arith.cmpi ne, %1, %c0_i32_0 : i32
    scf.if %2 {
      %cst_13 = arith.constant 0.000000e+00 : f32
      %33 = vector.broadcast %cst_13 : f32 to vector<8x128xf32>
      %c0_14 = arith.constant 0 : index
      %c0_15 = arith.constant 0 : index
      %34 = vector.load %arg5[%c0_14, %c0_15] : memref<8x128xf32, #tpu.memory_space<vmem>>, vector<8x128xf32>
      tpu.vector_store %arg5[%c0_14, %c0_15], %33 {strides = array<i32>} : memref<8x128xf32, #tpu.memory_space<vmem>>, vector<8x128xf32>,
    } else {
    }
    %c0 = arith.constant 0 : index
    %c0_1 = arith.constant 0 : index
    %c0_2 = arith.constant 0 : index
    %3 = vector.load %arg2[%c0, %c0_1, %c0_2] : memref<1x8x128xf32, #tpu.memory_space<vmem>>, vector<1x8x128xf32>
    %4 = vector.shape_cast %3 : vector<1x8x128xf32> to vector<8x128xf32>
    %c0_3 = arith.constant 0 : index
    %c0_4 = arith.constant 0 : index
    %c0_5 = arith.constant 0 : index
    %5 = vector.load %arg3[%c0_3, %c0_4, %c0_5] : memref<1x8x128xf32, #tpu.memory_space<vmem>>, vector<1x8x128xf32>
    %6 = vector.shape_cast %5 : vector<1x8x128xf32> to vector<8x128xf32>
    %cst = arith.constant 0.000000e+00 : f32
    %7 = vector.broadcast %cst : f32 to vector<8x128xf32>
    %8 = arith.maximumf %4, %7 : vector<8x128xf32>
    %9 = arith.mulf %6, %4 : vector<8x128xf32>
    %10 = arith.subf %8, %9 : vector<8x128xf32>
    %11 = math.absf %4 : vector<8x128xf32>
    %cst_6 = arith.constant 0.000000e+00 : f32
    %12 = vector.broadcast %cst_6 : f32 to vector<8x128xf32>
    %13 = arith.subf %12, %11 : vector<8x128xf32>
    %14 = math.exp %13 : vector<8x128xf32>
    %15 = math.log1p %14 : vector<8x128xf32>
    %16 = arith.addf %10, %15 : vector<8x128xf32>
    %c1_i32 = arith.constant 1 : i32
    %17 = arith.addi %arg1, %c1_i32 : i32
    %c8_i32 = arith.constant 8 : i32
    %18 = arith.muli %17, %c8_i32 : i32
    %c8_i32_7 = arith.constant 8 : i32
    %19 = arith.cmpi sle, %18, %c8_i32_7 : i32
    %c8_i32_8 = arith.constant 8 : i32
    %20 = arith.muli %arg0, %c8_i32_8 : i32
    %21 = arith.addi %20, %18 : i32
    %c128_i32 = arith.constant 128 : i32
    %22 = arith.muli %21, %c128_i32 : i32
    %c2048_i32 = arith.constant 2048 : i32
    %23 = arith.cmpi sle, %22, %c2048_i32 : i32
    %24 = arith.andi %19, %23 : i1
    %25 = arith.extui %24 : i1 to i32
    %c0_i32_9 = arith.constant 0 : i32
    %26 = arith.cmpi ne, %25, %c0_i32_9 : i32
    scf.if %26 {
      %c0_13 = arith.constant 0 : index
      %c0_14 = arith.constant 0 : index
      %33 = vector.load %arg5[%c0_13, %c0_14] : memref<8x128xf32, #tpu.memory_space<vmem>>, vector<8x128xf32>
      %34 = vector.shape_cast %16 : vector<8x128xf32> to vector<1x8x128xf32>
      %cst_15 = arith.constant dense<0.000000e+00> : vector<8x128xf32>
      %35 = vector.multi_reduction <add>, %34, %cst_15 [0] : vector<1x8x128xf32> to vector<8x128xf32>
      %36 = arith.addf %33, %35 : vector<8x128xf32>
      %c0_16 = arith.constant 0 : index
      %c0_17 = arith.constant 0 : index
      %37 = vector.load %arg5[%c0_16, %c0_17] : memref<8x128xf32, #tpu.memory_space<vmem>>, vector<8x128xf32>
      tpu.vector_store %arg5[%c0_16, %c0_17], %36 {strides = array<i32>} : memref<8x128xf32, #tpu.memory_space<vmem>>, vector<8x128xf32>,
    } else {
    }
    %true = arith.constant true
    %27 = arith.xori %24, %true : i1
    %28 = arith.extui %27 : i1 to i32
    %c0_i32_10 = arith.constant 0 : i32
    %29 = arith.cmpi ne, %28, %c0_i32_10 : i32
    scf.if %29 {
      %33 = tpu.iota {dimensions = array<i32: 0>} : vector<8x128xi32>
      %c8_i32_13 = arith.constant 8 : i32
      %34 = arith.muli %arg1, %c8_i32_13 : i32
      %35 = vector.broadcast %34 : i32 to vector<8x128xi32>
      %36 = arith.addi %33, %35 : vector<8x128xi32>
      %37 = tpu.iota {dimensions = array<i32: 1>} : vector<8x128xi32>
      %c8_i32_14 = arith.constant 8 : i32
      %38 = arith.muli %arg0, %c8_i32_14 : i32
      %39 = vector.broadcast %38 : i32 to vector<8x128xi32>
      %40 = arith.addi %39, %36 : vector<8x128xi32>
      %c128_i32_15 = arith.constant 128 : i32
      %41 = vector.broadcast %c128_i32_15 : i32 to vector<8x128xi32>
      %42 = arith.muli %40, %41 : vector<8x128xi32>
      %43 = arith.addi %42, %37 : vector<8x128xi32>
      %c8_i32_16 = arith.constant 8 : i32
      %44 = vector.broadcast %c8_i32_16 : i32 to vector<8x128xi32>
      %45 = arith.cmpi slt, %36, %44 : vector<8x128xi32>
      %c2048_i32_17 = arith.constant 2048 : i32
      %46 = vector.broadcast %c2048_i32_17 : i32 to vector<8x128xi32>
      %47 = arith.cmpi slt, %43, %46 : vector<8x128xi32>
      %48 = arith.andi %45, %47 : vector<8x128xi1>
      %c0_18 = arith.constant 0 : index
      %c0_19 = arith.constant 0 : index
      %49 = vector.load %arg5[%c0_18, %c0_19] : memref<8x128xf32, #tpu.memory_space<vmem>>, vector<8x128xf32>
      %cst_20 = arith.constant 0.000000e+00 : f32
      %50 = vector.broadcast %cst_20 : f32 to vector<8x128xf32>
      %51 = arith.select %48, %16, %50 : vector<8x128xi1>, vector<8x128xf32>
      %52 = vector.shape_cast %51 : vector<8x128xf32> to vector<1x8x128xf32>
      %cst_21 = arith.constant dense<0.000000e+00> : vector<8x128xf32>
      %53 = vector.multi_reduction <add>, %52, %cst_21 [0] : vector<1x8x128xf32> to vector<8x128xf32>
      %54 = arith.addf %49, %53 : vector<8x128xf32>
      %c0_22 = arith.constant 0 : index
      %c0_23 = arith.constant 0 : index
      %55 = vector.load %arg5[%c0_22, %c0_23] : memref<8x128xf32, #tpu.memory_space<vmem>>, vector<8x128xf32>
      tpu.vector_store %arg5[%c0_22, %c0_23], %54 {strides = array<i32>} : memref<8x128xf32, #tpu.memory_space<vmem>>, vector<8x128xf32>,
    } else {
    }
    %c0_i32_11 = arith.constant 0 : i32
    %30 = arith.cmpi eq, %arg1, %c0_i32_11 : i32
    %31 = arith.extui %30 : i1 to i32
    %c0_i32_12 = arith.constant 0 : i32
    %32 = arith.cmpi ne, %31, %c0_i32_12 : i32
    scf.if %32 {
      %c0_13 = arith.constant 0 : index
      %c0_14 = arith.constant 0 : index
      %33 = vector.load %arg5[%c0_13, %c0_14] : memref<8x128xf32, #tpu.memory_space<vmem>>, vector<8x128xf32>
      %34 = vector.shape_cast %33 : vector<8x128xf32> to vector<1x8x128xf32>
      %c0_15 = arith.constant 0 : index
      %c0_16 = arith.constant 0 : index
      %c0_17 = arith.constant 0 : index
      %35 = vector.load %arg4[%c0_15, %c0_16, %c0_17] : memref<1x8x128xf32, #tpu.memory_space<vmem>>, vector<1x8x128xf32>
      tpu.vector_store %arg4[%c0_15, %c0_16, %c0_17], %34 {strides = array<i32>} : memref<1x8x128xf32, #tpu.memory_space<vmem>>, vector<1x8x128xf32>,
    } else {
    }
    return
  }
  func.func @transform_0(%arg0: i32, %arg1: i32) -> (i32, i32, i32) {
    %c0_i32 = arith.constant 0 : i32
    %c0_i32_0 = arith.constant 0 : i32
    return %arg0, %arg1, %c0_i32 : i32, i32, i32
  }
  func.func @transform_1(%arg0: i32, %arg1: i32) -> (i32, i32, i32) {
    %c0_i32 = arith.constant 0 : i32
    %c0_i32_0 = arith.constant 0 : i32
    return %arg0, %arg1, %c0_i32 : i32, i32, i32
  }
  func.func @transform_2(%arg0: i32, %arg1: i32) -> (i32, i32, i32) {
    %c0_i32 = arith.constant 0 : i32
    %c0_i32_0 = arith.constant 0 : i32
    %c0_i32_1 = arith.constant 0 : i32
    return %arg0, %c0_i32, %c0_i32_0 : i32, i32, i32
  }
}

</mosaic_0001>

<llo_original>
// kernel: tpu_custom_call.1
$region0: #{tpu_custom_call.1}
  #allocation0 [shape = 'u32[]', space=smem, size = 0x4, offset = 0x4, fixed_abs, tag = 'smem constant byte address 0x4 - core index']
  #allocation1 [shape = 'u32[144,128]{1,0:T(1,128)}', space=vmem, size = 0x12000, scoped, tag = 'internal scratch']
  #allocation2 [shape = 'f32[8,128]{1,0:T(8,128)}', space=vmem, size = 0x1000, scoped, tag = 'scratch operand']
  %s0 = inlined_call_operand.hbm [shape: f32[2,8,128], index: 0, kind: input, shape index: {}]
  %s1 = inlined_call_operand.hbm [shape: f32[2,8,128], index: 1, kind: input, shape index: {}]
  %s2 = inlined_call_operand.hbm [shape: f32[2,8,128], index: 2, kind: output, shape index: {}]
  %s3 = sld [smem:[#allocation0]]
  $region65: #{tpu_custom_call.1} parent=0
    _
  %s5 = ssub.s32 1, %s3
  %s6 = scalar_select 0, %s5, %s3
  $region1: #{tpu_custom_call.1} parent=0
    #allocation3 [shape = 'u8[8192]{0}', space=vmem, size = 0x2000, scoped, tag = 'input window, operand 0']
    #allocation4 [shape = 's32[2]{0}', space=sflag, size = 0x8, scoped, tag = 'scoped memory for tpu_custom_call.1']
    #allocation5 [shape = 's32[2]{0}', space=sflag, size = 0x8, scoped, tag = 'scoped memory for tpu_custom_call.1']
    #allocation6 [shape = 'u8[8192]{0}', space=vmem, size = 0x2000, scoped, tag = 'input window, operand 1']
    #allocation7 [shape = 's32[2]{0}', space=sflag, size = 0x8, scoped, tag = 'scoped memory for tpu_custom_call.1']
    #allocation8 [shape = 'u8[8192]{0}', space=vmem, size = 0x2000, scoped, tag = 'output window, operand 0']
    %7 = vsyncpa [#allocation4], 0
    %s8 = scalar_lea.sflag [#allocation4], 1
    %9 = vsyncpa %s8, 0
    %10 = vsyncpa [#allocation7], 0
    %s11 = scalar_lea.sflag [#allocation7], 1
    %12 = vsyncpa %s11, 0
    %13 = vsyncpa [#allocation5], 0
    %s14 = scalar_lea.sflag [#allocation5], 1
    %15 = vsyncpa %s14, 0
    loop: start=0, step=1, limit=4
    $region2: #{tpu_custom_call.1} parent=1 // loop_pre_header
      _
    $region3: #{tpu_custom_call.1} parent=1 // loop_header
      %s17 = sphi 0, %s21
      %p18 = scmp.ge.s32.totalorder %s17, 4
      %s24 = sphi 0, %s36
      %s25 = sphi 0, %s32
      %s26 = sphi 0, %s24
      %s27 = sphi 0, %s25
      %s28 = sphi 0, %s26
      %s29 = sphi 0, %s27
      %s41 = sphi 0, %s43
      %s44 = sphi 0, %s41
      %s45 = sphi 0, %s44
      %s61 = sphi 0, %s45
      %s69 = sphi 0, %s71
      %s72 = sphi 0, %s69
      %s73 = sphi 0, %s72
      %s89 = sphi 0, %s73
      %s95 = sphi 0, %s97
      %s98 = sphi 0, %s95
      %s99 = sphi 0, %s98
      %s115 = sphi 0, %s99
    $region4: #{tpu_custom_call.1} parent=1 // loop_header_branch
      %20 = sbr.rel (%p18) target = $region8
    $region5: #{tpu_custom_call.1} parent=1 // loop_body
      %s22 = ssub.s32 %s17, 1
      %s23 = ssub.s32 %s17, 2
      %s30 = sadd.s32 1, %s25
      %p31 = scmp.ge.s32.totalorder %s30, 1
      %s32 = scalar_select %p31, 0, %s30
      %s33 = sadd.s32 1, %s24
      %s34 = scalar_select %p31, %s33, %s24
      %p35 = scmp.ge.s32.totalorder %s34, 2
      %s36 = scalar_select %p35, 0, %s34
      %s37 = ssub.s32 %s24, %s36
      %s38 = ssub.s32 %s25, %s32
      %s39 = sor.u32 %s37, %s38
      %p40 = scmp.eq.s32.totalorder %s39, 0
      %s42 = sadd.s32 %s41, 1
      %s43 = scalar_select %p40, %s41, %s42
      %p46 = pneg %p40
      %p47 = scmp.eq.s32.totalorder %s17, 1
      %p48 = por %p46, %p47
      %p49 = scmp.ne.s32.totalorder %s41, %s44
      %p50 = scmp.eq.s32.totalorder %s17, 0
      %p51 = por %p49, %p50
      %p52 = scmp.ne.s32.totalorder %s41, %s44
      %p53 = scmp.eq.s32.totalorder %s22, 1
      %p54 = por %p52, %p53
      %p55 = scmp.ne.s32.totalorder %s44, %s45
      %p56 = scmp.eq.s32.totalorder %s22, 0
      %p57 = por %p55, %p56
      %p58 = scmp.ne.s32.totalorder %s44, %s45
      %p59 = scmp.eq.s32.totalorder %s23, 1
      %p60 = por %p58, %p59
      %p62 = scmp.ne.s32.totalorder %s45, %s61
      %p63 = scmp.eq.s32.totalorder %s23, 0
      %p64 = por %p62, %p63
      %s65 = ssub.s32 %s24, %s36
      %s66 = ssub.s32 %s25, %s32
      %s67 = sor.u32 %s65, %s66
      %p68 = scmp.eq.s32.totalorder %s67, 0
      %s70 = sadd.s32 %s69, 1
      %s71 = scalar_select %p68, %s69, %s70
      %p74 = pneg %p68
      %p75 = scmp.eq.s32.totalorder %s17, 1
      %p76 = por %p74, %p75
      %p77 = scmp.ne.s32.totalorder %s69, %s72
      %p78 = scmp.eq.s32.totalorder %s17, 0
      %p79 = por %p77, %p78
      %p80 = scmp.ne.s32.totalorder %s69, %s72
      %p81 = scmp.eq.s32.totalorder %s22, 1
      %p82 = por %p80, %p81
      %p83 = scmp.ne.s32.totalorder %s72, %s73
      %p84 = scmp.eq.s32.totalorder %s22, 0
      %p85 = por %p83, %p84
      %p86 = scmp.ne.s32.totalorder %s72, %s73
      %p87 = scmp.eq.s32.totalorder %s23, 1
      %p88 = por %p86, %p87
      %p90 = scmp.ne.s32.totalorder %s73, %s89
      %p91 = scmp.eq.s32.totalorder %s23, 0
      %p92 = por %p90, %p91
      %s93 = ssub.s32 %s24, %s36
      %p94 = scmp.eq.s32.totalorder %s93, 0
      %s96 = sadd.s32 %s95, 1
      %s97 = scalar_select %p94, %s95, %s96
      %p100 = pneg %p94
      %p101 = scmp.eq.s32.totalorder %s17, 1
      %p102 = por %p100, %p101
      %p103 = scmp.ne.s32.totalorder %s95, %s98
      %p104 = scmp.eq.s32.totalorder %s17, 0
      %p105 = por %p103, %p104
      %p106 = scmp.ne.s32.totalorder %s95, %s98
      %p107 = scmp.eq.s32.totalorder %s22, 1
      %p108 = por %p106, %p107
      %p109 = scmp.ne.s32.totalorder %s98, %s99
      %p110 = scmp.eq.s32.totalorder %s22, 0
      %p111 = por %p109, %p110
      %p112 = scmp.ne.s32.totalorder %s98, %s99
      %p113 = scmp.eq.s32.totalorder %s23, 1
      %p114 = por %p112, %p113
      %p116 = scmp.ne.s32.totalorder %s99, %s115
      %p117 = scmp.eq.s32.totalorder %s23, 0
      %p118 = por %p116, %p117
      %p119 = scmp.le.s32.totalorder 1, %s17
      %p120 = scmp.lt.s32.totalorder %s17, 3
      %p121 = pnand %p119, %p120
      %p122 = pneg %p121
      // Predicated region
      $region9: #{tpu_custom_call.1} parent=5 // pred_check
        _
      $region10: #{tpu_custom_call.1} parent=5 // pred_check_branch
        %124 = sbr.rel (%p121) target = $region12
      $region11: #{tpu_custom_call.1} parent=5 // pred_region
        %s125 = ssub.s32 %s17, 1
      $region12: #{tpu_custom_call.1} parent=5 // pred_fallthru
        _
      %p126 = scmp.lt.s32.totalorder %s17, 2
      // Predicated region
      $region13: #{tpu_custom_call.1} parent=5 // pred_check
        %p127 = pneg %p126
      $region14: #{tpu_custom_call.1} parent=5 // pred_check_branch
        %129 = sbr.rel (%p127) target = $region16
      $region15: #{tpu_custom_call.1} parent=5 // pred_region
        // Predicated region
        $region17: #{tpu_custom_call.1} parent=15 // pred_check
          %p130 = pneg %p51
        $region18: #{tpu_custom_call.1} parent=15 // pred_check_branch
          %132 = sbr.rel (%p130) target = $region20
        $region19: #{tpu_custom_call.1} parent=15 // pred_region
          %s133 = sand.u32 %s41, 1
          %s134 = scalar_lea.sflag [#allocation4], %s133
          %s135 = sand.u32 %s41, 1
          %s136 = smul.addr %s135, 8
          %s137 = scalar_lea.vmem [#allocation3], %s136
          %s139 = ssub.s32 128, 128
          %140 = vsyncadd %s134, %s139
          %s141 = sadd.s32 %s25, %s24
          %s142 = smul.addr %s141, 128
          %s143 = scalar_lea.hbm %s0, %s142
          %s145 = sshll.u32 %s137, 4
          %s146 = int_to_ptr.vmem [resolvable:$true] %s145
          %148 = dma.hbm_to_vmem [thread:$0]  %s143, 128, %s146, %s134
        $region20: #{tpu_custom_call.1} parent=15 // pred_fallthru
          _
        // Predicated region
        $region21: #{tpu_custom_call.1} parent=15 // pred_check
          %p149 = pneg %p79
        $region22: #{tpu_custom_call.1} parent=15 // pred_check_branch
          %151 = sbr.rel (%p149) target = $region24
        $region23: #{tpu_custom_call.1} parent=15 // pred_region
          %s152 = sand.u32 %s69, 1
          %s153 = scalar_lea.sflag [#allocation7], %s152
          %s154 = sand.u32 %s69, 1
          %s155 = smul.addr %s154, 8
          %s156 = scalar_lea.vmem [#allocation6], %s155
          %s158 = ssub.s32 128, 128
          %159 = vsyncadd %s153, %s158
          %s160 = sadd.s32 %s25, %s24
          %s161 = smul.addr %s160, 128
          %s162 = scalar_lea.hbm %s1, %s161
          %s164 = sshll.u32 %s156, 4
          %s165 = int_to_ptr.vmem [resolvable:$true] %s164
          %167 = dma.hbm_to_vmem [thread:$0]  %s162, 128, %s165, %s153
        $region24: #{tpu_custom_call.1} parent=15 // pred_fallthru
          _
      $region16: #{tpu_custom_call.1} parent=5 // pred_fallthru
        _
      %p168 = scmp.le.s32.totalorder 1, %s17
      %p169 = scmp.lt.s32.totalorder %s17, 3
      %p170 = pnand %p168, %p169
      %p171 = pneg %p170
      // Predicated region
      $region25: #{tpu_custom_call.1} parent=5 // pred_check
        _
      $region26: #{tpu_custom_call.1} parent=5 // pred_check_branch
        %173 = sbr.rel (%p170) target = $region28
      $region27: #{tpu_custom_call.1} parent=5 // pred_region
        %s174 = ssub.s32 %s17, 1
        %s175 = sand.u32 %s44, 1
        %s176 = scalar_lea.sflag [#allocation4], %s175
        %s177 = sand.u32 %s44, 1
        %s178 = smul.addr %s177, 8
        %s179 = scalar_lea.vmem [#allocation3], %s178
        // Predicated region
        $region29: #{tpu_custom_call.1} parent=27 // pred_check
          %p180 = pneg %p57
        $region30: #{tpu_custom_call.1} parent=27 // pred_check_branch
          %182 = sbr.rel (%p180) target = $region32
        $region31: #{tpu_custom_call.1} parent=27 // pred_region
          %183 = dma.done %s176, 128
        $region32: #{tpu_custom_call.1} parent=27 // pred_fallthru
          _
        %s184 = sand.u32 %s72, 1
        %s185 = scalar_lea.sflag [#allocation7], %s184
        %s186 = sand.u32 %s72, 1
        %s187 = smul.addr %s186, 8
        %s188 = scalar_lea.vmem [#allocation6], %s187
        // Predicated region
        $region33: #{tpu_custom_call.1} parent=27 // pred_check
          %p189 = pneg %p85
        $region34: #{tpu_custom_call.1} parent=27 // pred_check_branch
          %191 = sbr.rel (%p189) target = $region36
        $region35: #{tpu_custom_call.1} parent=27 // pred_region
          %192 = dma.done %s185, 128
        $region36: #{tpu_custom_call.1} parent=27 // pred_fallthru
          _
        %s193 = sand.u32 %s44, 1
        %s194 = scalar_lea.sflag [#allocation4], %s193
        %s195 = sand.u32 %s44, 1
        %s196 = smul.addr %s195, 8
        %s197 = scalar_lea.vmem [#allocation3], %s196
        %p198 = pneg %p57
        %p199 = pneg %p54
        %s200 = sand.u32 %s72, 1
        %s201 = scalar_lea.sflag [#allocation7], %s200
        %s202 = sand.u32 %s72, 1
        %s203 = smul.addr %s202, 8
        %s204 = scalar_lea.vmem [#allocation6], %s203
        %p205 = pneg %p85
        %p206 = pneg %p82
        %p207 = pneg %p111
        %p208 = pneg %p108
        %s209 = sand.u32 %s98, 1
        %s210 = scalar_lea.sflag [#allocation5], %s209
        %s211 = sand.u32 %s98, 1
        %s212 = smul.addr %s211, 8
        %s213 = scalar_lea.vmem [#allocation8], %s212
        %p214 = scmp.eq.s32.totalorder %s27, 0
        // Predicated region
        $region37: #{tpu_custom_call.1} parent=27 // pred_check
          %p215 = pneg %p214
        $region38: #{tpu_custom_call.1} parent=27 // pred_check_branch
          %217 = sbr.rel (%p215) target = $region40
        $region39: #{tpu_custom_call.1} parent=27 // pred_region
          %218 = vst [vmem:[#allocation2] sm:$0xff] 0.0
        $region40: #{tpu_custom_call.1} parent=27 // pred_fallthru
          _
        %v219 = vld [vmem:[%s179] sm:$0xff]
        %v220 = vld [vmem:[%s188] sm:$0xff]
        %v221 = vmax.f32 %v219, 0.0
        %v222 = vmul.f32 %v220, %v219
        %v223 = vsub.f32 %v221, %v222
        %v224 = vand.u32 2147483647, %v219
        %v225 = vsub.f32 0.0, %v224
        %v226 = vmul.f32 %v225, 1.442695
        %v227 = vpow.pop %v226
        %v228 = vadd.f32 %v227, 1.0
        %v229 = vlog2.pop %v228
        %v230 = vmul.f32 %v229, 0.6931472
        %v231 = vmul.f32 -0.5, %v227
        %v232 = vadd.f32 %v231, 1.0
        %v233 = vmul.f32 %v232, %v227
        %v234 = vand.u32 2147483647, %v227
        %vm235 = vcmp.lt.f32.partialorder %v234, 0.0004427343
        %v236 = vsel %vm235, %v233, %v230
        %v237 = vadd.f32 %v223, %v236
        %s238 = sadd.s32 %s27, 1
        %s239 = smul.u32 %s238, 8
        %p240 = scmp.le.s32.totalorder %s239, 8
        %s241 = smul.u32 %s26, 8
        %s242 = sadd.s32 %s241, %s239
        %s243 = smul.u32 %s242, 128
        %p244 = scmp.le.s32.totalorder %s243, 2048
        %p245 = pnand %p240, %p244
        %p246 = pneg %p245
        // Predicated region
        $region41: #{tpu_custom_call.1} parent=27 // pred_check
          _
        $region42: #{tpu_custom_call.1} parent=27 // pred_check_branch
          %248 = sbr.rel (%p245) target = $region44
        $region43: #{tpu_custom_call.1} parent=27 // pred_region
          %v249 = vld [vmem:[#allocation2] sm:$0xff]
          %v250 = vadd.f32 %v237, 0.0
          %v251 = vadd.f32 %v249, %v250
          %252 = vst [vmem:[#allocation2] sm:$0xff] %v251
        $region44: #{tpu_custom_call.1} parent=27 // pred_fallthru
          _
        %p253 = pneg %p246
        // Predicated region
        $region45: #{tpu_custom_call.1} parent=27 // pred_check
          _
        $region46: #{tpu_custom_call.1} parent=27 // pred_check_branch
          %255 = sbr.rel (%p246) target = $region48
        $region47: #{tpu_custom_call.1} parent=27 // pred_region
          %v256 = vlaneseq
          %v257 = vshrl.u32 %v256, 7
          %s258 = smul.u32 %s27, 8
          %v259 = vstv %s258
          %v260 = vadd.s32 %v257, %v259
          %v261 = vlaneseq
          %v262 = vand.u32 %v261, 127
          %v263 = vstv %s241
          %v264 = vadd.s32 %v263, %v260
          %v265 = vmul.u32 %v264, 128
          %v266 = vadd.s32 %v265, %v262
          %vm267 = vcmp.lt.s32.totalorder %v260, 8
          %vm268 = vcmp.lt.s32.totalorder %v266, 2048
          %vm269 = vmand %vm267, %vm268
          %v270 = vld [vmem:[#allocation2] sm:$0xff]
          %v271 = vsel %vm269, %v237, 0.0
          %v272 = vadd.f32 %v271, 0.0
          %v273 = vadd.f32 %v270, %v272
          %274 = vst [vmem:[#allocation2] sm:$0xff] %v273
        $region48: #{tpu_custom_call.1} parent=27 // pred_fallthru
          _
        // Predicated region
        $region49: #{tpu_custom_call.1} parent=27 // pred_check
          %p275 = pneg %p214
        $region50: #{tpu_custom_call.1} parent=27 // pred_check_branch
          %277 = sbr.rel (%p275) target = $region52
        $region51: #{tpu_custom_call.1} parent=27 // pred_region
          %v278 = vld [vmem:[#allocation2] sm:$0xff]
          %279 = vst [vmem:[%s213] sm:$0xff] %v278
        $region52: #{tpu_custom_call.1} parent=27 // pred_fallthru
          _
        %s280 = sand.u32 %s98, 1
        %s281 = scalar_lea.sflag [#allocation5], %s280
        %s282 = sand.u32 %s98, 1
        %s283 = smul.addr %s282, 8
        %s284 = scalar_lea.vmem [#allocation8], %s283
        // Predicated region
        $region53: #{tpu_custom_call.1} parent=27 // pred_check
          %p285 = pneg %p108
        $region54: #{tpu_custom_call.1} parent=27 // pred_check_branch
          %287 = sbr.rel (%p285) target = $region56
        $region55: #{tpu_custom_call.1} parent=27 // pred_region
          %s289 = ssub.s32 128, 128
          %290 = vsyncadd %s281, %s289
          %s291 = smul.addr %s26, 128
          %s292 = scalar_lea.hbm %s2, %s291
          %s294 = sshll.u32 %s284, 4
          %s295 = int_to_ptr.vmem [resolvable:$true] %s294
          %297 = dma.vmem_to_hbm [thread:$0]  %s295, 128, %s292, %s281
        $region56: #{tpu_custom_call.1} parent=27 // pred_fallthru
          _
      $region28: #{tpu_custom_call.1} parent=5 // pred_fallthru
        _
      %p298 = scmp.le.s32.totalorder 2, %s17
      // Predicated region
      $region57: #{tpu_custom_call.1} parent=5 // pred_check
        %p299 = pneg %p298
      $region58: #{tpu_custom_call.1} parent=5 // pred_check_branch
        %301 = sbr.rel (%p299) target = $region60
      $region59: #{tpu_custom_call.1} parent=5 // pred_region
        %s302 = ssub.s32 %s17, 2
        // Predicated region
        $region61: #{tpu_custom_call.1} parent=59 // pred_check
          %p303 = pneg %p114
        $region62: #{tpu_custom_call.1} parent=59 // pred_check_branch
          %305 = sbr.rel (%p303) target = $region64
        $region63: #{tpu_custom_call.1} parent=59 // pred_region
          %s306 = sand.u32 %s99, 1
          %s307 = scalar_lea.sflag [#allocation5], %s306
          %s308 = sand.u32 %s99, 1
          %s309 = smul.addr %s308, 8
          %s310 = scalar_lea.vmem [#allocation8], %s309
          %311 = dma.done %s307, 128
        $region64: #{tpu_custom_call.1} parent=59 // pred_fallthru
          _
      $region60: #{tpu_custom_call.1} parent=5 // pred_fallthru
        _
    $region6: #{tpu_custom_call.1} parent=1 // loop_footer
      %s21 = sadd.s32 1, %s17
    $region7: #{tpu_custom_call.1} parent=1 // loop_footer_branch
      %16 = sbr.rel target = $region3
    $region8: #{tpu_custom_call.1} parent=1 // loop_exit
      _
    %312 = vsyncpa [#allocation4], 1
    %s313 = scalar_lea.sflag [#allocation4], 1
    %314 = vsyncpa %s313, 1
    %315 = vsyncpa [#allocation7], 1
    %s316 = scalar_lea.sflag [#allocation7], 1
    %317 = vsyncpa %s316, 1
    %318 = vsyncpa [#allocation5], 1
    %s319 = scalar_lea.sflag [#allocation5], 1
    %320 = vsyncpa %s319, 1

</llo_original>
